<compile_context>
chip_gen: v7x
topology: tpu7x:2x2x1
jax: 0.10.0
libtpu: 0.0.40
codegen_flags: <defaults>
</compile_context>

<pallas_src>
import numpy as np
import jax
import jax.numpy as jnp
from jax import lax
from jax.experimental import pallas as pl
from jax.experimental.pallas import tpu as pltpu

_EPS = 1e-5  # torch.nn.InstanceNorm2d default eps


def _feature_modulation_kernel(w_ref, b_ref, fm_ref, fg_ref, o_ref):
    """Fused gamma/beta 1x1 convs + InstanceNorm + modulation.

    w:  (2C, C)    stacked [W_gamma; W_beta] 1x1-conv weights
    b:  (2C, 1)    stacked [b_gamma; b_beta] biases
    fm: (1, C, HW) content features (instance-normalized)
    fg: (1, C, HW) guidance features (drive gamma/beta)
    o:  (1, C, HW) output
    """
    C = fm_ref.shape[1]
    fg = fg_ref[0]                       # (C, HW)
    fm = fm_ref[0]                       # (C, HW)

    # Both 1x1 convs as one MXU matmul over channels, bias folded in.
    gb = jnp.dot(w_ref[...], fg, preferred_element_type=jnp.float32) + b_ref[...]
    gamma = gb[:C]                       # (C, HW)
    beta = gb[C:]                        # (C, HW)

    # InstanceNorm2d (affine=False, biased variance, eps=1e-5):
    # per-channel statistics over the spatial axis.
    mean = jnp.mean(fm, axis=-1, keepdims=True)            # (C, 1)
    xc = fm - mean
    var = jnp.mean(xc * xc, axis=-1, keepdims=True)         # (C, 1)
    inv = lax.rsqrt(var + _EPS)                             # EUP rsqrt

    o_ref[0] = (xc * inv * gamma + beta).astype(o_ref.dtype)


def feature_modulation(fm_encoder, fg_encoder, w_gamma, b_gamma, w_beta, b_beta):
    """Equivalent of FeatureModulation.forward.

    fm_encoder, fg_encoder : (B, C, H, W) float32
    w_gamma, w_beta        : (C, C, 1, 1) PyTorch Conv2d 1x1 weights
    b_gamma, b_beta        : (C,) biases
    returns                : (B, C, H, W)
    """
    B, C, H, W = fm_encoder.shape
    HW = H * W

    # Host-side glue: flatten 1x1-conv weights and stack into one matmul operand.
    w = jnp.concatenate(
        [w_gamma.reshape(C, C), w_beta.reshape(C, C)], axis=0)        # (2C, C)
    b = jnp.concatenate([b_gamma, b_beta], axis=0)[:, None]           # (2C, 1)

    fm_flat = fm_encoder.reshape(B, C, HW)
    fg_flat = fg_encoder.reshape(B, C, HW)

    out = pl.pallas_call(
        _feature_modulation_kernel,
        out_shape=jax.ShapeDtypeStruct((B, C, HW), fm_encoder.dtype),
        grid=(B,),
        in_specs=[
            pl.BlockSpec((2 * C, C), lambda i: (0, 0)),     # stacked weights (shared)
            pl.BlockSpec((2 * C, 1), lambda i: (0, 0)),     # stacked biases  (shared)
            pl.BlockSpec((1, C, HW), lambda i: (i, 0, 0)),  # fm slab
            pl.BlockSpec((1, C, HW), lambda i: (i, 0, 0)),  # fg slab
        ],
        out_specs=pl.BlockSpec((1, C, HW), lambda i: (i, 0, 0)),
        compiler_params=pltpu.CompilerParams(
            dimension_semantics=("parallel",)),
    )(w, b, fm_flat, fg_flat)

    return out.reshape(B, C, H, W)


def _reference(fm, fg, wg, bg, wb, bb):
    """Pure-JAX reference matching the PyTorch module."""
    B, C, H, W = fm.shape
    gamma = jnp.einsum('oi,bihw->bohw', wg.reshape(C, C), fg,
                       precision=lax.Precision.HIGHEST) + bg[None, :, None, None]
    beta = jnp.einsum('oi,bihw->bohw', wb.reshape(C, C), fg,
                      precision=lax.Precision.HIGHEST) + bb[None, :, None, None]
    mean = jnp.mean(fm, axis=(2, 3), keepdims=True)
    var = jnp.mean((fm - mean) ** 2, axis=(2, 3), keepdims=True)
    fm_n = (fm - mean) / jnp.sqrt(var + _EPS)
    return fm_n * gamma + beta


if __name__ == "__main__":
    key = jax.random.PRNGKey(0)
    B, C, H, W = 2, 8, 16, 16          # input_dim = 8 channels, 16x16 spatial
    k1, k2, k3, k4, k5, k6 = jax.random.split(key, 6)

    fm = jax.random.normal(k1, (B, C, H, W), dtype=jnp.float32)
    fg = jax.random.normal(k2, (B, C, H, W), dtype=jnp.float32)
    # PyTorch Conv2d(kernel_size=1) parameter layouts: (out, in, 1, 1), (out,)
    wg = jax.random.normal(k3, (C, C, 1, 1), dtype=jnp.float32) * 0.1
    bg = jax.random.normal(k4, (C,), dtype=jnp.float32) * 0.1
    wb = jax.random.normal(k5, (C, C, 1, 1), dtype=jnp.float32) * 0.1
    bb = jax.random.normal(k6, (C,), dtype=jnp.float32) * 0.1

    out = feature_modulation(fm, fg, wg, bg, wb, bb)
    jax.block_until_ready(out)

    ref = _reference(fm, fg, wg, bg, wb, bb)
    assert out.shape == (B, C, H, W)
    np.testing.assert_allclose(np.asarray(out), np.asarray(ref),
                               rtol=2e-4, atol=2e-4)
    print("KERNEL_OK")
</pallas_src>

<mosaic_0001>
module attributes {stable_mosaic.version = 11 : i64} {
  func.func @_feature_modulation_kernel(%arg0: i32, %arg1: memref<16x8xf32, #tpu.memory_space<vmem>>, %arg2: memref<16x1xf32, #tpu.memory_space<vmem>>, %arg3: memref<1x8x256xf32, #tpu.memory_space<vmem>>, %arg4: memref<1x8x256xf32, #tpu.memory_space<vmem>>, %arg5: memref<1x8x256xf32, #tpu.memory_space<vmem>>) attributes {dimension_semantics = [#tpu.dimension_semantics<parallel>], iteration_bounds = array<i64: 2>, scalar_prefetch = 0 : i64, scratch_operands = 0 : i64, tpu.core_type = #tpu.core_type<tc>, window_params = [{pipeline_mode = #tpu.pipeline_mode<synchronous>, transform_indices = @transform_0, window_bounds = array<i64: 16, 8>}, {pipeline_mode = #tpu.pipeline_mode<synchronous>, transform_indices = @transform_1, window_bounds = array<i64: 16, 1>}, {transform_indices = @transform_2, window_bounds = array<i64: 1, 8, 256>}, {transform_indices = @transform_3, window_bounds = array<i64: 1, 8, 256>}, {transform_indices = @transform_4, window_bounds = array<i64: 1, 8, 256>}]} {
    %c0 = arith.constant 0 : index
    %c0_0 = arith.constant 0 : index
    %c0_1 = arith.constant 0 : index
    %0 = vector.load %arg4[%c0, %c0_0, %c0_1] : memref<1x8x256xf32, #tpu.memory_space<vmem>>, vector<1x8x256xf32>
    %1 = vector.shape_cast %0 : vector<1x8x256xf32> to vector<8x256xf32>
    %c0_2 = arith.constant 0 : index
    %c0_3 = arith.constant 0 : index
    %c0_4 = arith.constant 0 : index
    %2 = vector.load %arg3[%c0_2, %c0_3, %c0_4] : memref<1x8x256xf32, #tpu.memory_space<vmem>>, vector<1x8x256xf32>
    %3 = vector.shape_cast %2 : vector<1x8x256xf32> to vector<8x256xf32>
    %c0_5 = arith.constant 0 : index
    %c0_6 = arith.constant 0 : index
    %4 = vector.load %arg1[%c0_5, %c0_6] : memref<16x8xf32, #tpu.memory_space<vmem>>, vector<16x8xf32>
    %cst = arith.constant dense<0.000000e+00> : vector<16x256xf32>
    %5 = tpu.matmul %4, %1, %cst {dimension_numbers = #tpu.dot_dimension_numbers<[1], [0], [0], [1], [0, 0, 1, 1], [], []>} : vector<16x8xf32>, vector<8x256xf32>, vector<16x256xf32> -> vector<16x256xf32>
    %c0_7 = arith.constant 0 : index
    %c0_8 = arith.constant 0 : index
    %6 = vector.load %arg2[%c0_7, %c0_8] : memref<16x1xf32, #tpu.memory_space<vmem>>, vector<16x1xf32>
    %7 = vector.broadcast %6 : vector<16x1xf32> to vector<16x256xf32>
    %8 = arith.addf %5, %7 : vector<16x256xf32>
    %9 = vector.extract_strided_slice %8 {offsets = [0, 0], sizes = [8, 256], strides = [1, 1]} : vector<16x256xf32> to vector<8x256xf32>
    %10 = vector.extract_strided_slice %8 {offsets = [8, 0], sizes = [8, 256], strides = [1, 1]} : vector<16x256xf32> to vector<8x256xf32>
    %cst_9 = arith.constant dense<0.000000e+00> : vector<8xf32>
    %11 = vector.multi_reduction <add>, %3, %cst_9 [1] : vector<8x256xf32> to vector<8xf32>
    %12 = vector.shape_cast %11 : vector<8xf32> to vector<8x1xf32>
    %cst_10 = arith.constant 2.560000e+02 : f32
    %13 = vector.broadcast %cst_10 : f32 to vector<8x1xf32>
    %14 = arith.divf %12, %13 : vector<8x1xf32>
    %15 = vector.broadcast %14 : vector<8x1xf32> to vector<8x256xf32>
    %16 = arith.subf %3, %15 : vector<8x256xf32>
    %17 = arith.mulf %16, %16 : vector<8x256xf32>
    %cst_11 = arith.constant dense<0.000000e+00> : vector<8xf32>
    %18 = vector.multi_reduction <add>, %17, %cst_11 [1] : vector<8x256xf32> to vector<8xf32>
    %19 = vector.shape_cast %18 : vector<8xf32> to vector<8x1xf32>
    %cst_12 = arith.constant 2.560000e+02 : f32
    %20 = vector.broadcast %cst_12 : f32 to vector<8x1xf32>
    %21 = arith.divf %19, %20 : vector<8x1xf32>
    %cst_13 = arith.constant 9.99999974E-6 : f32
    %22 = vector.broadcast %cst_13 : f32 to vector<8x1xf32>
    %23 = arith.addf %21, %22 : vector<8x1xf32>
    %24 = math.rsqrt %23 : vector<8x1xf32>
    %25 = vector.broadcast %24 : vector<8x1xf32> to vector<8x256xf32>
    %26 = arith.mulf %16, %25 : vector<8x256xf32>
    %27 = arith.mulf %26, %9 : vector<8x256xf32>
    %28 = arith.addf %27, %10 : vector<8x256xf32>
    %c0_14 = arith.constant 0 : index
    %c0_15 = arith.constant 0 : index
    %c0_16 = arith.constant 0 : index
    %29 = vector.load %arg5[%c0_14, %c0_15, %c0_16] : memref<1x8x256xf32, #tpu.memory_space<vmem>>, vector<1x8x256xf32>
    %30 = vector.shape_cast %29 : vector<1x8x256xf32> to vector<8x256xf32>
    %31 = vector.shape_cast %28 : vector<8x256xf32> to vector<1x8x256xf32>
    tpu.vector_store %arg5[%c0_14, %c0_15, %c0_16], %31 {strides = array<i32>} : memref<1x8x256xf32, #tpu.memory_space<vmem>>, vector<1x8x256xf32>,
    return
  }
  func.func @transform_0(%arg0: i32) -> (i32, i32) {
    %c0_i32 = arith.constant 0 : i32
    %c0_i32_0 = arith.constant 0 : i32
    %c0_i32_1 = arith.constant 0 : i32
    return %c0_i32, %c0_i32_0 : i32, i32
  }
  func.func @transform_1(%arg0: i32) -> (i32, i32) {
    %c0_i32 = arith.constant 0 : i32
    %c0_i32_0 = arith.constant 0 : i32
    %c0_i32_1 = arith.constant 0 : i32
    return %c0_i32, %c0_i32_0 : i32, i32
  }
  func.func @transform_2(%arg0: i32) -> (i32, i32, i32) {
    %c0_i32 = arith.constant 0 : i32
    %c0_i32_0 = arith.constant 0 : i32
    %c0_i32_1 = arith.constant 0 : i32
    return %arg0, %c0_i32, %c0_i32_0 : i32, i32, i32
  }
  func.func @transform_3(%arg0: i32) -> (i32, i32, i32) {
    %c0_i32 = arith.constant 0 : i32
    %c0_i32_0 = arith.constant 0 : i32
    %c0_i32_1 = arith.constant 0 : i32
    return %arg0, %c0_i32, %c0_i32_0 : i32, i32, i32
  }
  func.func @transform_4(%arg0: i32) -> (i32, i32, i32) {
    %c0_i32 = arith.constant 0 : i32
    %c0_i32_0 = arith.constant 0 : i32
    %c0_i32_1 = arith.constant 0 : i32
    return %arg0, %c0_i32, %c0_i32_0 : i32, i32, i32
  }
}

</mosaic_0001>

<llo_original>
// kernel: tpu_custom_call.1
$region0: #{tpu_custom_call.1}
  #allocation0 [shape = 'u32[]', space=smem, size = 0x4, offset = 0x4, fixed_abs, tag = 'smem constant byte address 0x4 - core index']
  #allocation1 [shape = 'u32[144,128]{1,0:T(1,128)}', space=vmem, size = 0x12000, scoped, tag = 'internal scratch']
  %s0 = inlined_call_operand.vmem [shape: f32[16,8], index: 0, kind: input, shape index: {}]
  %s1 = inlined_call_operand.vmem [shape: f32[16,1], index: 1, kind: input, shape index: {}]
  %s2 = inlined_call_operand.vmem [shape: f32[2,8,256], index: 2, kind: input, shape index: {}]
  %s3 = inlined_call_operand.hbm [shape: f32[2,8,256], index: 3, kind: input, shape index: {}]
  %s4 = inlined_call_operand.hbm [shape: f32[2,8,256], index: 4, kind: output, shape index: {}]
  %s5 = sld [smem:[#allocation0]]
  $region53: #{tpu_custom_call.1} parent=0
    _
  %s7 = ssub.s32 1, %s5
  %s8 = scalar_select 0, %s7, %s5
  $region1: #{tpu_custom_call.1} parent=0
    #allocation2 [shape = 'u8[16384]{0}', space=vmem, size = 0x4000, scoped, tag = 'input window, operand 3']
    #allocation3 [shape = 's32[2]{0}', space=sflag, size = 0x8, scoped, tag = 'scoped memory for tpu_custom_call.1']
    #allocation4 [shape = 's32[2]{0}', space=sflag, size = 0x8, scoped, tag = 'scoped memory for tpu_custom_call.1']
    #allocation5 [shape = 'u8[16384]{0}', space=vmem, size = 0x4000, scoped, tag = 'output window, operand 0']
    %9 = vsyncpa [#allocation3], 0
    %s10 = scalar_lea.sflag [#allocation3], 1
    %11 = vsyncpa %s10, 0
    %12 = vsyncpa [#allocation4], 0
    %s13 = scalar_lea.sflag [#allocation4], 1
    %14 = vsyncpa %s13, 0
    loop: start=0, step=1, limit=4
    $region2: #{tpu_custom_call.1} parent=1 // loop_pre_header
      _
    $region3: #{tpu_custom_call.1} parent=1 // loop_header
      %s16 = sphi 0, %s20
      %p17 = scmp.ge.s32.totalorder %s16, 4
      %s24 = sphi 0, %s24
      %s26 = sphi 0, %s24
      %s27 = sphi 0, %s26
      %s41 = sphi 0, %s27
      %s45 = sphi 0, %s45
      %s47 = sphi 0, %s45
      %s48 = sphi 0, %s47
      %s62 = sphi 0, %s48
      %s68 = sphi 0, %s70
      %s71 = sphi 0, %s68
      %s72 = sphi 0, %s71
      %s88 = sphi 0, %s72
      %s94 = sphi 0, %s96
      %s97 = sphi 0, %s94
      %s98 = sphi 0, %s97
      %s114 = sphi 0, %s98
      %s120 = sphi 0, %s122
      %s123 = sphi 0, %s120
      %s124 = sphi 0, %s123
      %s140 = sphi 0, %s124
    $region4: #{tpu_custom_call.1} parent=1 // loop_header_branch
      %19 = sbr.rel (%p17) target = $region8
    $region5: #{tpu_custom_call.1} parent=1 // loop_body
      %s21 = ssub.s32 %s16, 1
      %s22 = ssub.s32 %s16, 2
      %s23 = sadd.s32 %s16, 1
      %s25 = sadd.s32 %s24, 1
      %p28 = scmp.eq.s32.totalorder %s16, 1
      %p29 = scmp.ne.s32.totalorder %s24, %s26
      %p30 = scmp.eq.s32.totalorder %s16, 0
      %p31 = por %p29, %p30
      %p32 = scmp.ne.s32.totalorder %s24, %s26
      %p33 = scmp.eq.s32.totalorder %s21, 1
      %p34 = por %p32, %p33
      %p35 = scmp.ne.s32.totalorder %s26, %s27
      %p36 = scmp.eq.s32.totalorder %s21, 0
      %p37 = por %p35, %p36
      %p38 = scmp.ne.s32.totalorder %s26, %s27
      %p39 = scmp.eq.s32.totalorder %s22, 1
      %p40 = por %p38, %p39
      %p42 = scmp.ne.s32.totalorder %s27, %s41
      %p43 = scmp.eq.s32.totalorder %s22, 0
      %p44 = por %p42, %p43
      %s46 = sadd.s32 %s45, 1
      %p49 = scmp.eq.s32.totalorder %s16, 1
      %p50 = scmp.ne.s32.totalorder %s45, %s47
      %p51 = scmp.eq.s32.totalorder %s16, 0
      %p52 = por %p50, %p51
      %p53 = scmp.ne.s32.totalorder %s45, %s47
      %p54 = scmp.eq.s32.totalorder %s21, 1
      %p55 = por %p53, %p54
      %p56 = scmp.ne.s32.totalorder %s47, %s48
      %p57 = scmp.eq.s32.totalorder %s21, 0
      %p58 = por %p56, %p57
      %p59 = scmp.ne.s32.totalorder %s47, %s48
      %p60 = scmp.eq.s32.totalorder %s22, 1
      %p61 = por %p59, %p60
      %p63 = scmp.ne.s32.totalorder %s48, %s62
      %p64 = scmp.eq.s32.totalorder %s22, 0
      %p65 = por %p63, %p64
      %s66 = ssub.s32 %s16, %s23
      %p67 = scmp.eq.s32.totalorder %s66, 0
      %s69 = sadd.s32 %s68, 1
      %s70 = scalar_select %p67, %s68, %s69
      %p73 = pneg %p67
      %p74 = scmp.eq.s32.totalorder %s16, 1
      %p75 = por %p73, %p74
      %p76 = scmp.ne.s32.totalorder %s68, %s71
      %p77 = scmp.eq.s32.totalorder %s16, 0
      %p78 = por %p76, %p77
      %p79 = scmp.ne.s32.totalorder %s68, %s71
      %p80 = scmp.eq.s32.totalorder %s21, 1
      %p81 = por %p79, %p80
      %p82 = scmp.ne.s32.totalorder %s71, %s72
      %p83 = scmp.eq.s32.totalorder %s21, 0
      %p84 = por %p82, %p83
      %p85 = scmp.ne.s32.totalorder %s71, %s72
      %p86 = scmp.eq.s32.totalorder %s22, 1
      %p87 = por %p85, %p86
      %p89 = scmp.ne.s32.totalorder %s72, %s88
      %p90 = scmp.eq.s32.totalorder %s22, 0
      %p91 = por %p89, %p90
      %s92 = ssub.s32 %s16, %s23
      %p93 = scmp.eq.s32.totalorder %s92, 0
      %s95 = sadd.s32 %s94, 1
      %s96 = scalar_select %p93, %s94, %s95
      %p99 = pneg %p93
      %p100 = scmp.eq.s32.totalorder %s16, 1
      %p101 = por %p99, %p100
      %p102 = scmp.ne.s32.totalorder %s94, %s97
      %p103 = scmp.eq.s32.totalorder %s16, 0
      %p104 = por %p102, %p103
      %p105 = scmp.ne.s32.totalorder %s94, %s97
      %p106 = scmp.eq.s32.totalorder %s21, 1
      %p107 = por %p105, %p106
      %p108 = scmp.ne.s32.totalorder %s97, %s98
      %p109 = scmp.eq.s32.totalorder %s21, 0
      %p110 = por %p108, %p109
      %p111 = scmp.ne.s32.totalorder %s97, %s98
      %p112 = scmp.eq.s32.totalorder %s22, 1
      %p113 = por %p111, %p112
      %p115 = scmp.ne.s32.totalorder %s98, %s114
      %p116 = scmp.eq.s32.totalorder %s22, 0
      %p117 = por %p115, %p116
      %s118 = ssub.s32 %s16, %s23
      %p119 = scmp.eq.s32.totalorder %s118, 0
      %s121 = sadd.s32 %s120, 1
      %s122 = scalar_select %p119, %s120, %s121
      %p125 = pneg %p119
      %p126 = scmp.eq.s32.totalorder %s16, 1
      %p127 = por %p125, %p126
      %p128 = scmp.ne.s32.totalorder %s120, %s123
      %p129 = scmp.eq.s32.totalorder %s16, 0
      %p130 = por %p128, %p129
      %p131 = scmp.ne.s32.totalorder %s120, %s123
      %p132 = scmp.eq.s32.totalorder %s21, 1
      %p133 = por %p131, %p132
      %p134 = scmp.ne.s32.totalorder %s123, %s124
      %p135 = scmp.eq.s32.totalorder %s21, 0
      %p136 = por %p134, %p135
      %p137 = scmp.ne.s32.totalorder %s123, %s124
      %p138 = scmp.eq.s32.totalorder %s22, 1
      %p139 = por %p137, %p138
      %p141 = scmp.ne.s32.totalorder %s124, %s140
      %p142 = scmp.eq.s32.totalorder %s22, 0
      %p143 = por %p141, %p142
      %p144 = scmp.le.s32.totalorder 1, %s16
      %p145 = scmp.lt.s32.totalorder %s16, 3
      %p146 = pnand %p144, %p145
      %p147 = pneg %p146
      // Predicated region
      $region9: #{tpu_custom_call.1} parent=5 // pred_check
        _
      $region10: #{tpu_custom_call.1} parent=5 // pred_check_branch
        %149 = sbr.rel (%p146) target = $region12
      $region11: #{tpu_custom_call.1} parent=5 // pred_region
        %s150 = ssub.s32 %s16, 1
        // Predicated region
        $region13: #{tpu_custom_call.1} parent=11 // pred_check
          %p151 = pneg %p37
        $region14: #{tpu_custom_call.1} parent=11 // pred_check_branch
          %153 = sbr.rel (%p151) target = $region16
        $region15: #{tpu_custom_call.1} parent=11 // pred_region
          _
        $region16: #{tpu_custom_call.1} parent=11 // pred_fallthru
          _
        // Predicated region
        $region17: #{tpu_custom_call.1} parent=11 // pred_check
          %p154 = pneg %p58
        $region18: #{tpu_custom_call.1} parent=11 // pred_check_branch
          %156 = sbr.rel (%p154) target = $region20
        $region19: #{tpu_custom_call.1} parent=11 // pred_region
          _
        $region20: #{tpu_custom_call.1} parent=11 // pred_fallthru
          _
      $region12: #{tpu_custom_call.1} parent=5 // pred_fallthru
        _
      %p157 = scmp.lt.s32.totalorder %s16, 2
      // Predicated region
      $region21: #{tpu_custom_call.1} parent=5 // pred_check
        %p158 = pneg %p157
      $region22: #{tpu_custom_call.1} parent=5 // pred_check_branch
        %160 = sbr.rel (%p158) target = $region24
      $region23: #{tpu_custom_call.1} parent=5 // pred_region
        // Predicated region
        $region25: #{tpu_custom_call.1} parent=23 // pred_check
          %p161 = pneg %p78
        $region26: #{tpu_custom_call.1} parent=23 // pred_check_branch
          %163 = sbr.rel (%p161) target = $region28
        $region27: #{tpu_custom_call.1} parent=23 // pred_region
          %p164 = scmp.lt.s32.totalorder %s16, 1
          %s165 = scalar_select %p164, %s16, 1
          %s166 = smul.addr %s165, 2
          %s167 = smul.addr %s166, 8
          %s168 = scalar_lea.vmem %s2, %s167
        $region28: #{tpu_custom_call.1} parent=23 // pred_fallthru
          _
        // Predicated region
        $region29: #{tpu_custom_call.1} parent=23 // pred_check
          %p169 = pneg %p104
        $region30: #{tpu_custom_call.1} parent=23 // pred_check_branch
          %171 = sbr.rel (%p169) target = $region32
        $region31: #{tpu_custom_call.1} parent=23 // pred_region
          %s172 = sand.u32 %s94, 1
          %s173 = scalar_lea.sflag [#allocation3], %s172
          %s174 = sand.u32 %s94, 1
          %s175 = smul.addr %s174, 16
          %s176 = scalar_lea.vmem [#allocation2], %s175
          %s178 = ssub.s32 256, 256
          %179 = vsyncadd %s173, %s178
          %s180 = smul.addr %s16, 2
          %s181 = smul.addr %s180, 128
          %s182 = scalar_lea.hbm %s3, %s181
          %s184 = sshll.u32 %s176, 4
          %s185 = int_to_ptr.vmem [resolvable:$true] %s184
          %187 = dma.hbm_to_vmem [thread:$0]  %s182, 256, %s185, %s173
        $region32: #{tpu_custom_call.1} parent=23 // pred_fallthru
          _
      $region24: #{tpu_custom_call.1} parent=5 // pred_fallthru
        _
      %p188 = scmp.le.s32.totalorder 1, %s16
      %p189 = scmp.lt.s32.totalorder %s16, 3
      %p190 = pnand %p188, %p189
      %p191 = pneg %p190
      // Predicated region
      $region33: #{tpu_custom_call.1} parent=5 // pred_check
        _
      $region34: #{tpu_custom_call.1} parent=5 // pred_check_branch
        %193 = sbr.rel (%p190) target = $region36
      $region35: #{tpu_custom_call.1} parent=5 // pred_region
        %s194 = ssub.s32 %s16, 1
        %s195 = sand.u32 %s97, 1
        %s196 = scalar_lea.sflag [#allocation3], %s195
        %s197 = sand.u32 %s97, 1
        %s198 = smul.addr %s197, 16
        %s199 = scalar_lea.vmem [#allocation2], %s198
        // Predicated region
        $region37: #{tpu_custom_call.1} parent=35 // pred_check
          %p200 = pneg %p110
        $region38: #{tpu_custom_call.1} parent=35 // pred_check_branch
          %202 = sbr.rel (%p200) target = $region40
        $region39: #{tpu_custom_call.1} parent=35 // pred_region
          %203 = dma.done %s196, 256
        $region40: #{tpu_custom_call.1} parent=35 // pred_fallthru
          _
        %p204 = pneg %p37
        %p205 = pneg %p34
        %p206 = pneg %p58
        %p207 = pneg %p55
        %p208 = scmp.lt.s32.totalorder %s21, 1
        %s209 = scalar_select %p208, %s21, 1
        %s210 = smul.addr %s209, 2
        %s211 = smul.addr %s210, 8
        %s212 = scalar_lea.vmem %s2, %s211
        %p213 = pneg %p84
        %p214 = pneg %p81
        %s215 = sand.u32 %s97, 1
        %s216 = scalar_lea.sflag [#allocation3], %s215
        %s217 = sand.u32 %s97, 1
        %s218 = smul.addr %s217, 16
        %s219 = scalar_lea.vmem [#allocation2], %s218
        %p220 = pneg %p110
        %p221 = pneg %p107
        %p222 = pneg %p136
        %p223 = pneg %p133
        %s224 = sand.u32 %s123, 1
        %s225 = scalar_lea.sflag [#allocation4], %s224
        %s226 = sand.u32 %s123, 1
        %s227 = smul.addr %s226, 16
        %s228 = scalar_lea.vmem [#allocation5], %s227
        %p229 = scmp.lt.s32.totalorder %s21, 1
        %s230 = scalar_select %p229, %s21, 1
        %s231 = smul.addr %s230, 2
        %s232 = smul.addr %s231, 8
        %s233 = scalar_lea.vmem %s2, %s232
        %v234 = vld [vmem:[%s199] sm:$0xff]
        %v235 = vld [vmem:[%s199 + $0x8] sm:$0xff]
        %v236 = vld [vmem:[%s233] sm:$0xff]
        %v237 = vld [vmem:[%s233 + $0x8] sm:$0xff]
        %v238 = vld [vmem:[%s0] sm:$0xff]
        %v239 = vld [vmem:[%s0 + $0x8] sm:$0xff]
        %v240 = vld [vmem:[%s1] sm:$0xff]
        %v241 = vld [vmem:[%s1 + $0x8] sm:$0xff]
        %243 = vset.pattern.permute.xlu0 0
        %244 = vperm.xlu0 %243, %v240
        %v245 = vpop.permute.xlu0 %244
        %248 = vset.pattern.permute.xlu0 0
        %249 = vperm.xlu0 %248, %v241
        %v250 = vpop.permute.xlu0 %249
        %vm252 = vcmask 64512
        %v254 = vsel %vm252, %v238, 0
        %v257 = vsel %vm252, %v239, 0
        %259 = vmatprep.subr.mxu0 %v235
        %260 = vmatpush1.msra.mxu0 %v234
        %261 = vmatprep.subr.mxu0 0.0
        %262 = vmatpush1.msra.mxu0 0.0
        %263 = vmatprep.subr.mxu0 0.0
        %264 = vmatpush1.msra.mxu0 0.0
        %265 = vmatprep.subr.mxu0 0.0
        %266 = vmatpush1.msra.mxu0 0.0
        %267 = vmatprep.subr.mxu0 0.0
        %268 = vmatpush1.msra.mxu0 0.0
        %269 = vmatprep.subr.mxu0 0.0
        %270 = vmatpush1.msra.mxu0 0.0
        %271 = vmatprep.subr.mxu0 0.0
        %272 = vmatpush1.msra.mxu0 0.0
        %273 = vmatprep.subr.mxu0 0.0
        %274 = vmatpush1.msra.mxu0 0.0
        %275 = vmatprep.subr.mxu0 0.0
        %276 = vmatpush1.msra.mxu0 0.0
        %277 = vmatprep.subr.mxu0 0.0
        %278 = vmatpush1.msra.mxu0 0.0
        %279 = vmatprep.subr.mxu0 0.0
        %280 = vmatpush1.msra.mxu0 0.0
        %281 = vmatprep.subr.mxu0 0.0
        %282 = vmatpush1.msra.mxu0 0.0
        %283 = vmatprep.subr.mxu0 0.0
        %284 = vmatpush1.msra.mxu0 0.0
        %285 = vmatprep.subr.mxu0 0.0
        %286 = vmatpush1.msra.mxu0 0.0
        %287 = vmatprep.subr.mxu0 0.0
        %288 = vmatpush1.msra.mxu0 0.0
        %289 = vmatprep.subr.mxu0 0.0
        %290 = vmatpush1.msra.mxu0 0.0
        %291 = vmatprep.subr.mxu0 0.0
        %292 = vmatpush1.msra.mxu0 0.0
        %293 = vmatprep.subr.mxu0 0.0
        %294 = vmatpush1.msra.mxu0 0.0
        %295 = vmatprep.subr.mxu0 0.0
        %296 = vmatpush1.msra.mxu0 0.0
        %297 = vmatprep.subr.mxu0 0.0
        %298 = vmatpush1.msra.mxu0 0.0
        %299 = vmatprep.subr.mxu0 0.0
        %300 = vmatpush1.msra.mxu0 0.0
        %301 = vmatprep.subr.mxu0 0.0
        %302 = vmatpush1.msra.mxu0 0.0
        %303 = vmatprep.subr.mxu0 0.0
        %304 = vmatpush1.msra.mxu0 0.0
        %305 = vmatprep.subr.mxu0 0.0
        %306 = vmatpush1.msra.mxu0 0.0
        %307 = vmatprep.subr.mxu0 0.0
        %308 = vmatpush1.msra.mxu0 0.0
        %309 = vmatprep.subr.mxu0 0.0
        %310 = vmatpush1.msra.mxu0 0.0
        %311 = vmatprep.subr.mxu0 0.0
        %312 = vmatpush1.msra.mxu0 0.0
        %313 = vmatprep.subr.mxu0 0.0
        %314 = vmatpush1.msra.mxu0 0.0
        %315 = vmatprep.subr.mxu0 0.0
        %316 = vmatpush1.msra.mxu0 0.0
        %317 = vmatprep.subr.mxu0 0.0
        %318 = vmatpush1.msra.mxu0 0.0
        %319 = vmatprep.subr.mxu0 0.0
        %320 = vmatpush1.msra.mxu0 0.0
        %321 = vmatprep.subr.mxu0 0.0
        %322 = vmatpush1.msra.mxu0 0.0
        %323 = vmatprep.mubr.f32.mxu0 0.0
        %324 = vmatmul.mubr.f32.gmra.mrb[0].mxu0 %v254
        %v325 = vpop.f32.mrb[0].mxu0
        %v326 = vadd.f32 %v245, %v325
        %v327 = vpop.f32.mrb[0].mxu0
        %v328 = vadd.f32 %v245, %v327
        %329 = vmatprep.mubr.f32.mxu0 0.0
        %330 = vmatmul.mubr.f32.gmra.mrb[0].mxu0 %v257
        %v331 = vpop.f32.mrb[0].mxu0
        %v332 = vadd.f32 %v250, %v331
        %v333 = vpop.f32.mrb[0].mxu0
        %v334 = vadd.f32 %v250, %v333
        %335 = vdwg.mxu0
        %v336 = vadd.f32 %v236, %v237
        %337 = vadd.xlane.f32.xlu0 %v336
        %v338 = vpop.xlane.xlu0 %337
        %v339 = vrcp.pop 256.0
        %v340 = vmul.f32 %v338, %v339
        %v341 = vsub.f32 %v236, %v340
        %v342 = vsub.f32 %v237, %v340
        %v343 = vmul.f32 %v341, %v341
        %v344 = vmul.f32 %v342, %v342
        %v345 = vadd.f32 %v343, %v344
        %346 = vadd.xlane.f32.xlu0 %v345
        %v347 = vpop.xlane.xlu0 %346
        %v348 = vmul.f32 %v347, %v339
        %v349 = vadd.f32 %v348, 1e-05
        %v350 = vrsqrt.pop %v349
        %v351 = vmul.f32 %v341, %v350
        %v352 = vmul.f32 %v342, %v350
        %v353 = vmul.f32 %v351, %v326
        %v354 = vmul.f32 %v352, %v328
        %v355 = vadd.f32 %v353, %v332
        %v356 = vadd.f32 %v354, %v334
        %357 = vst [vmem:[%s228] sm:$0xff] %v355
        %358 = vst [vmem:[%s228 + $0x8] sm:$0xff] %v356
        %s359 = sand.u32 %s123, 1
        %s360 = scalar_lea.sflag [#allocation4], %s359
        %s361 = sand.u32 %s123, 1
        %s362 = smul.addr %s361, 16
        %s363 = scalar_lea.vmem [#allocation5], %s362
        // Predicated region
        $region41: #{tpu_custom_call.1} parent=35 // pred_check
          %p364 = pneg %p133
        $region42: #{tpu_custom_call.1} parent=35 // pred_check_branch
          %366 = sbr.rel (%p364) target = $region44
        $region43: #{tpu_custom_call.1} parent=35 // pred_region
          %s368 = ssub.s32 256, 256
          %369 = vsyncadd %s360, %s368
          %s370 = smul.addr %s21, 2
          %s371 = smul.addr %s370, 128
          %s372 = scalar_lea.hbm %s4, %s371
          %s374 = sshll.u32 %s363, 4
          %s375 = int_to_ptr.vmem [resolvable:$true] %s374
          %377 = dma.vmem_to_hbm [thread:$0]  %s375, 256, %s372, %s360
        $region44: #{tpu_custom_call.1} parent=35 // pred_fallthru
          _
      $region36: #{tpu_custom_call.1} parent=5 // pred_fallthru
        _
      %p378 = scmp.le.s32.totalorder 2, %s16
      // Predicated region
      $region45: #{tpu_custom_call.1} parent=5 // pred_check
        %p379 = pneg %p378
      $region46: #{tpu_custom_call.1} parent=5 // pred_check_branch
        %381 = sbr.rel (%p379) target = $region48
      $region47: #{tpu_custom_call.1} parent=5 // pred_region
        %s382 = ssub.s32 %s16, 2
        // Predicated region
        $region49: #{tpu_custom_call.1} parent=47 // pred_check
          %p383 = pneg %p139
        $region50: #{tpu_custom_call.1} parent=47 // pred_check_branch
          %385 = sbr.rel (%p383) target = $region52
        $region51: #{tpu_custom_call.1} parent=47 // pred_region
          %s386 = sand.u32 %s124, 1
          %s387 = scalar_lea.sflag [#allocation4], %s386
          %s388 = sand.u32 %s124, 1
          %s389 = smul.addr %s388, 16
          %s390 = scalar_lea.vmem [#allocation5], %s389
          %391 = dma.done %s387, 256
        $region52: #{tpu_custom_call.1} parent=47 // pred_fallthru
          _
      $region48: #{tpu_custom_call.1} parent=5 // pred_fallthru
        _
    $region6: #{tpu_custom_call.1} parent=1 // loop_footer
      %s20 = sadd.s32 1, %s16
    $region7: #{tpu_custom_call.1} parent=1 // loop_footer_branch
      %15 = sbr.rel target = $region3
    $region8: #{tpu_custom_call.1} parent=1 // loop_exit
      _
    %392 = vsyncpa [#allocation3], 1
    %s393 = scalar_lea.sflag [#allocation3], 1
    %394 = vsyncpa %s393, 1
    %395 = vsyncpa [#allocation4], 1
    %s396 = scalar_lea.sflag [#allocation4], 1
    %397 = vsyncpa %s396, 1

</llo_original>
